<compile_context>
chip_gen: v6e
topology: v6e:2x2x1
jax: 0.10.0
libtpu: 0.0.40
codegen_flags: <defaults>
</compile_context>

<pallas_src>
import functools

import jax
import jax.numpy as jnp
from jax.experimental import pallas as pl
from jax.experimental.pallas import tpu as pltpu


def _excite(pooled, wa, wb, b2, use_mxu):
    """Per-channel gate sigmoid(W2 @ relu(W1 @ pooled) + b2) as a (C, 1) column.

    pooled, b2 : (C, 1) f32
    use_mxu    : wa = W1   (Cr, C), wb = W2 (C, Cr)  -> MXU matvecs
    otherwise  : wa = W1.T (C, Cr), wb = W2 (C, Cr)  -> VPU broadcast-reduce
    """
    wa = wa.astype(jnp.float32)
    wb = wb.astype(jnp.float32)
    if use_mxu:
        h = jnp.maximum(
            jnp.dot(wa, pooled, preferred_element_type=jnp.float32), 0.0)   # (Cr, 1)
        z = jnp.dot(wb, h, preferred_element_type=jnp.float32)              # (C, 1)
    else:
        h = jnp.maximum(
            jnp.sum(wa * pooled, axis=0, keepdims=True), 0.0)               # (1, Cr)
        z = jnp.sum(wb * h, axis=1, keepdims=True)                          # (C, 1)
    return jax.nn.sigmoid(z + b2.astype(jnp.float32))                       # (C, 1)


# --------------------------- fused (small maps) ---------------------------

def _se_fused_kernel(x_ref, wa_ref, wb_ref, b2_ref, o_ref, *, nb, use_mxu):
    wa = wa_ref[...]
    wb = wb_ref[...]
    b2 = b2_ref[...]
    # nb images per block, statically unrolled (nb is capped small).
    for i in range(nb):
        xi = x_ref[i]                                                        # (C, HW)
        pooled = jnp.mean(xi, axis=1, keepdims=True, dtype=jnp.float32)      # (C, 1)
        gate = _excite(pooled, wa, wb, b2, use_mxu)                          # (C, 1) f32
        o_ref[i] = (xi.astype(jnp.float32) * gate).astype(o_ref.dtype)


# ---------------------- tiled (large maps, two passes) --------------------

def _pool_excite_kernel(x_ref, wa_ref, wb_ref, b2_ref, gate_ref, acc_ref, *,
                        hw, hw_tile, use_mxu):
    t = pl.program_id(1)

    @pl.when(t == 0)
    def _init():
        acc_ref[...] = jnp.zeros_like(acc_ref)

    x = x_ref[0].astype(jnp.float32)                                         # (C, hw_tile)
    if hw % hw_tile != 0:
        # Mask the out-of-range lanes of the final partial tile.
        col = jax.lax.broadcasted_iota(jnp.int32, x.shape, 1) + t * hw_tile
        x = jnp.where(col < hw, x, 0.0)
    acc_ref[...] += jnp.sum(x, axis=1, keepdims=True)                        # (C, 1)

    @pl.when(t == pl.num_programs(1) - 1)
    def _finish():
        pooled = acc_ref[...] * (1.0 / hw)
        gate_ref[0] = _excite(pooled, wa_ref[...], wb_ref[...], b2_ref[...],
                              use_mxu)


def _scale_kernel(x_ref, gate_ref, o_ref):
    g = gate_ref[0]                                                          # (C, 1) f32
    o_ref[0] = (x_ref[0].astype(jnp.float32) * g).astype(o_ref.dtype)


# --------------------------------- wrapper --------------------------------

def _vmem_tile_bytes(shape, dtype):
    """Approximate VMEM footprint of one buffer holding `shape` (ndim >= 2)."""
    *lead, r, c = shape
    n = 1
    for d in lead:
        n *= d
    r_pad = -(-r // 8) * 8
    c_pad = -(-c // 128) * 128
    return n * r_pad * c_pad * jnp.dtype(dtype).itemsize


def se_block_pallas(x_nchw, w1, w2, b2):
    """x_nchw: (N, C, H, W); w1: (Cr, C) no bias; w2: (C, Cr); b2: (C,)."""
    N, C, H, W = x_nchw.shape
    Cr = w1.shape[0]
    HW = H * W
    dtype = x_nchw.dtype
    itemsize = jnp.dtype(dtype).itemsize

    x_flat = x_nchw.reshape(N, C, HW)            # reshape only, NO transpose
    b2_col = b2.reshape(C, 1)

    # Excitation engine: MXU matvecs for large C, VPU broadcast-reduce otherwise.
    use_mxu = C >= 256
    if use_mxu:
        wa, wb = w1, w2                          # (Cr, C), (C, Cr)
    else:
        wa, wb = w1.T, w2                        # (C, Cr), (C, Cr) (tiny weight transpose)

    # Per-generation VMEM budget (v7x: 64 MiB, v5e/v6e: 128 MiB).
    try:
        vmem_cap = int(pltpu.get_tpu_info().vmem_capacity_bytes)
    except Exception:
        vmem_cap = 64 << 20                      # conservative (v7x) default
    usable = vmem_cap - (8 << 20)                # headroom for compiler scratch
    budget = (usable * 3) // 4

    per_img = _vmem_tile_bytes((C, HW), dtype)
    weight_bytes = 2 * (_vmem_tile_bytes(wa.shape, wa.dtype)
                        + _vmem_tile_bytes(wb.shape, wb.dtype)
                        + _vmem_tile_bytes(b2_col.shape, b2_col.dtype))
    slack = 2 << 20

    x_bytes = N * C * HW * itemsize
    w_raw = int(w1.size * w1.dtype.itemsize + w2.size * w2.dtype.itemsize
                + b2.size * b2.dtype.itemsize)
    flops = int(N * (2 * C * HW + 4 * C * Cr + 3 * C))
    transcendentals = int(N * C)

    fused_fits = 4 * per_img + weight_bytes + slack <= budget

    if fused_fits:
        # Pack several images per block to amortize per-grid-step overhead.
        target_blk = min(8 << 20, budget // 5)
        nb = 1
        for d in range(1, N + 1):
            if (N % d == 0 and d <= 16 and d * per_img <= target_blk
                    and 4 * d * per_img + weight_bytes + slack <= budget):
                nb = d
        steps = N // nb
        in_bufs = 3 if (steps >= 3
                        and 5 * nb * per_img + weight_bytes + slack <= budget) else 2
        needed = (in_bufs + 2) * nb * per_img + weight_bytes + slack
        vmem_limit = int(min(max(needed, 32 << 20), usable))

        blk = (nb, C, HW)
        if in_bufs > 2:
            x_spec = pl.BlockSpec(blk, lambda n: (n, 0, 0),
                                  pipeline_mode=pl.Buffered(in_bufs))
        else:
            x_spec = pl.BlockSpec(blk, lambda n: (n, 0, 0))

        kernel = functools.partial(_se_fused_kernel, nb=nb, use_mxu=use_mxu)
        out_flat = pl.pallas_call(
            kernel,
            out_shape=jax.ShapeDtypeStruct((N, C, HW), dtype),
            grid_spec=pltpu.PrefetchScalarGridSpec(
                num_scalar_prefetch=0,
                grid=(steps,),
                in_specs=[
                    x_spec,
                    pl.BlockSpec(wa.shape, lambda n: (0, 0)),
                    pl.BlockSpec(wb.shape, lambda n: (0, 0)),
                    pl.BlockSpec(b2_col.shape, lambda n: (0, 0)),
                ],
                out_specs=pl.BlockSpec(blk, lambda n: (n, 0, 0)),
            ),
            compiler_params=pltpu.CompilerParams(
                dimension_semantics=("parallel",),
                vmem_limit_bytes=vmem_limit,
            ),
            cost_estimate=pl.CostEstimate(
                flops=flops, transcendentals=transcendentals,
                bytes_accessed=int(2 * x_bytes + w_raw)),
        )(x_flat, wa, wb, b2_col)
        return out_flat.reshape(N, C, H, W)

    # ---- Tiled two-pass path: per-image map too large to double-buffer. ----
    if HW >= 128:
        thw = max(128, ((2 << 20) // max(C * itemsize, 1)) // 128 * 128)
        thw = min(thw, (HW // 128) * 128)
    else:
        thw = HW
    n_t = -(-HW // thw)
    tile_bytes = _vmem_tile_bytes((C, thw), dtype)
    gate_bytes = _vmem_tile_bytes((C, 1), jnp.float32)
    vmem_a = int(min(max(3 * tile_bytes + weight_bytes + 2 * gate_bytes + slack,
                         32 << 20), usable))
    vmem_b = int(min(max(4 * tile_bytes + 2 * gate_bytes + slack,
                         32 << 20), usable))

    # Pass 1: pool + excite -> per-channel gate (N, C, 1) f32.
    # TODO(synk): at N=1 this pooling pass still runs on a single TensorCore;
    # sharding the HW reduction across cores would need a partial-sum combine.
    pool_kernel = functools.partial(_pool_excite_kernel, hw=HW, hw_tile=thw,
                                    use_mxu=use_mxu)
    gate = pl.pallas_call(
        pool_kernel,
        out_shape=jax.ShapeDtypeStruct((N, C, 1), jnp.float32),
        grid_spec=pltpu.PrefetchScalarGridSpec(
            num_scalar_prefetch=0,
            grid=(N, n_t),
            in_specs=[
                pl.BlockSpec((1, C, thw), lambda n, t: (n, 0, t)),
                pl.BlockSpec(wa.shape, lambda n, t: (0, 0)),
                pl.BlockSpec(wb.shape, lambda n, t: (0, 0)),
                pl.BlockSpec(b2_col.shape, lambda n, t: (0, 0)),
            ],
            out_specs=pl.BlockSpec((1, C, 1), lambda n, t: (n, 0, 0)),
            scratch_shapes=[pltpu.VMEM((C, 1), jnp.float32)],
        ),
        compiler_params=pltpu.CompilerParams(
            dimension_semantics=("parallel", "arbitrary"),
            vmem_limit_bytes=vmem_a),
        cost_estimate=pl.CostEstimate(
            flops=int(N * (C * HW + 4 * C * Cr)),
            transcendentals=transcendentals,
            bytes_accessed=int(x_bytes + w_raw + N * C * 4)),
    )(x_flat, wa, wb, b2_col)

    # Pass 2: scale, fully parallel over (N, HW tiles) -> shards across TCs.
    out_flat = pl.pallas_call(
        _scale_kernel,
        out_shape=jax.ShapeDtypeStruct((N, C, HW), dtype),
        grid_spec=pltpu.PrefetchScalarGridSpec(
            num_scalar_prefetch=0,
            grid=(N, n_t),
            in_specs=[
                pl.BlockSpec((1, C, thw), lambda n, t: (n, 0, t)),
                pl.BlockSpec((1, C, 1), lambda n, t: (n, 0, 0)),
            ],
            out_specs=pl.BlockSpec((1, C, thw), lambda n, t: (n, 0, t)),
        ),
        compiler_params=pltpu.CompilerParams(
            dimension_semantics=("parallel", "parallel"),
            vmem_limit_bytes=vmem_b),
        cost_estimate=pl.CostEstimate(
            flops=int(N * C * HW), transcendentals=0,
            bytes_accessed=int(2 * x_bytes + N * C * 4)),
    )(x_flat, gate)
    return out_flat.reshape(N, C, H, W)


def se_block_ref(x, w1, w2, b2):
    # Pure-JAX reference matching the PyTorch forward.
    pooled = jnp.mean(x, axis=(2, 3))                       # (N, C)
    h = jnp.maximum(pooled @ w1.T, 0.0)                     # (N, Cr)
    z = jax.nn.sigmoid(h @ w2.T + b2)                       # (N, C)
    return x * z[:, :, None, None]


if __name__ == "__main__":
    N, C, H, W = 2, 4, 16, 16
    reduction_ratio = 2
    Cr = C // reduction_ratio

    key = jax.random.PRNGKey(0)
    kx, k1, k2, kb = jax.random.split(key, 4)

    x = jax.random.normal(kx, (N, C, H, W), dtype=jnp.float32)
    # Deterministic synthetic params (PyTorch-Linear-like uniform init).
    w1 = jax.random.uniform(k1, (Cr, C), minval=-1.0, maxval=1.0,
                            dtype=jnp.float32) / jnp.sqrt(C)
    w2 = jax.random.uniform(k2, (C, Cr), minval=-1.0, maxval=1.0,
                            dtype=jnp.float32) / jnp.sqrt(Cr)
    b2 = jax.random.uniform(kb, (C,), minval=-1.0, maxval=1.0,
                            dtype=jnp.float32) / jnp.sqrt(Cr)

    out = jax.block_until_ready(se_block_pallas(x, w1, w2, b2))
    ref = se_block_ref(x, w1, w2, b2)
    assert out.shape == (N, C, H, W)
    assert jnp.allclose(out, ref, atol=1e-5, rtol=1e-5)

    print("KERNEL_OK")
</pallas_src>

<mosaic_0001>
module attributes {stable_mosaic.version = 11 : i64} {
  func.func @_se_fused_kernel(%arg0: i32, %arg1: memref<2x4x256xf32, #tpu.memory_space<vmem>>, %arg2: memref<4x2xf32, #tpu.memory_space<vmem>>, %arg3: memref<4x2xf32, #tpu.memory_space<vmem>>, %arg4: memref<4x1xf32, #tpu.memory_space<vmem>>, %arg5: memref<2x4x256xf32, #tpu.memory_space<vmem>>) attributes {dimension_semantics = [#tpu.dimension_semantics<parallel>], iteration_bounds = array<i64: 1>, scalar_prefetch = 0 : i64, scratch_operands = 0 : i64, tpu.core_type = #tpu.core_type<tc>, window_params = [{transform_indices = @transform_0, window_bounds = array<i64: 2, 4, 256>}, {pipeline_mode = #tpu.pipeline_mode<synchronous>, transform_indices = @transform_1, window_bounds = array<i64: 4, 2>}, {pipeline_mode = #tpu.pipeline_mode<synchronous>, transform_indices = @transform_2, window_bounds = array<i64: 4, 2>}, {pipeline_mode = #tpu.pipeline_mode<synchronous>, transform_indices = @transform_3, window_bounds = array<i64: 4, 1>}, {transform_indices = @transform_4, window_bounds = array<i64: 2, 4, 256>}]} {
    %c0 = arith.constant 0 : index
    %c0_0 = arith.constant 0 : index
    %0 = vector.load %arg2[%c0, %c0_0] : memref<4x2xf32, #tpu.memory_space<vmem>>, vector<4x2xf32>
    %c0_1 = arith.constant 0 : index
    %c0_2 = arith.constant 0 : index
    %1 = vector.load %arg3[%c0_1, %c0_2] : memref<4x2xf32, #tpu.memory_space<vmem>>, vector<4x2xf32>
    %c0_3 = arith.constant 0 : index
    %c0_4 = arith.constant 0 : index
    %2 = vector.load %arg4[%c0_3, %c0_4] : memref<4x1xf32, #tpu.memory_space<vmem>>, vector<4x1xf32>
    %c0_5 = arith.constant 0 : index
    %c0_6 = arith.constant 0 : index
    %c0_7 = arith.constant 0 : index
    %3 = vector.load %arg1[%c0_5, %c0_6, %c0_7] : memref<2x4x256xf32, #tpu.memory_space<vmem>>, vector<1x4x256xf32>
    %4 = vector.shape_cast %3 : vector<1x4x256xf32> to vector<4x256xf32>
    %cst = arith.constant dense<0.000000e+00> : vector<4xf32>
    %5 = vector.multi_reduction <add>, %4, %cst [1] : vector<4x256xf32> to vector<4xf32>
    %6 = vector.shape_cast %5 : vector<4xf32> to vector<4x1xf32>
    %cst_8 = arith.constant 2.560000e+02 : f32
    %7 = vector.broadcast %cst_8 : f32 to vector<4x1xf32>
    %8 = arith.divf %6, %7 : vector<4x1xf32>
    %9 = vector.broadcast %8 : vector<4x1xf32> to vector<4x2xf32>
    %10 = arith.mulf %0, %9 : vector<4x2xf32>
    %cst_9 = arith.constant dense<0.000000e+00> : vector<2xf32>
    %11 = vector.multi_reduction <add>, %10, %cst_9 [0] : vector<4x2xf32> to vector<2xf32>
    %12 = vector.shape_cast %11 : vector<2xf32> to vector<1x2xf32>
    %cst_10 = arith.constant 0.000000e+00 : f32
    %13 = vector.broadcast %cst_10 : f32 to vector<1x2xf32>
    %14 = arith.maximumf %12, %13 : vector<1x2xf32>
    %15 = vector.broadcast %14 : vector<1x2xf32> to vector<4x2xf32>
    %16 = arith.mulf %1, %15 : vector<4x2xf32>
    %cst_11 = arith.constant dense<0.000000e+00> : vector<4xf32>
    %17 = vector.multi_reduction <add>, %16, %cst_11 [1] : vector<4x2xf32> to vector<4xf32>
    %18 = vector.shape_cast %17 : vector<4xf32> to vector<4x1xf32>
    %19 = arith.addf %18, %2 : vector<4x1xf32>
    %20 = arith.negf %19 : vector<4x1xf32>
    %21 = math.exp %20 : vector<4x1xf32>
    %cst_12 = arith.constant 1.000000e+00 : f32
    %22 = vector.broadcast %cst_12 : f32 to vector<4x1xf32>
    %23 = arith.addf %22, %21 : vector<4x1xf32>
    %24 = arith.divf %22, %23 : vector<4x1xf32>
    %25 = vector.broadcast %24 : vector<4x1xf32> to vector<4x256xf32>
    %26 = arith.mulf %4, %25 : vector<4x256xf32>
    %c0_13 = arith.constant 0 : index
    %c0_14 = arith.constant 0 : index
    %c0_15 = arith.constant 0 : index
    %27 = vector.load %arg5[%c0_13, %c0_14, %c0_15] : memref<2x4x256xf32, #tpu.memory_space<vmem>>, vector<1x4x256xf32>
    %28 = vector.shape_cast %27 : vector<1x4x256xf32> to vector<4x256xf32>
    %29 = vector.shape_cast %26 : vector<4x256xf32> to vector<1x4x256xf32>
    tpu.vector_store %arg5[%c0_13, %c0_14, %c0_15], %29 {strides = array<i32>} : memref<2x4x256xf32, #tpu.memory_space<vmem>>, vector<1x4x256xf32>,
    %c1 = arith.constant 1 : index
    %c0_16 = arith.constant 0 : index
    %c0_17 = arith.constant 0 : index
    %30 = vector.load %arg1[%c1, %c0_16, %c0_17] : memref<2x4x256xf32, #tpu.memory_space<vmem>>, vector<1x4x256xf32>
    %31 = vector.shape_cast %30 : vector<1x4x256xf32> to vector<4x256xf32>
    %cst_18 = arith.constant dense<0.000000e+00> : vector<4xf32>
    %32 = vector.multi_reduction <add>, %31, %cst_18 [1] : vector<4x256xf32> to vector<4xf32>
    %33 = vector.shape_cast %32 : vector<4xf32> to vector<4x1xf32>
    %cst_19 = arith.constant 2.560000e+02 : f32
    %34 = vector.broadcast %cst_19 : f32 to vector<4x1xf32>
    %35 = arith.divf %33, %34 : vector<4x1xf32>
    %36 = vector.broadcast %35 : vector<4x1xf32> to vector<4x2xf32>
    %37 = arith.mulf %0, %36 : vector<4x2xf32>
    %cst_20 = arith.constant dense<0.000000e+00> : vector<2xf32>
    %38 = vector.multi_reduction <add>, %37, %cst_20 [0] : vector<4x2xf32> to vector<2xf32>
    %39 = vector.shape_cast %38 : vector<2xf32> to vector<1x2xf32>
    %cst_21 = arith.constant 0.000000e+00 : f32
    %40 = vector.broadcast %cst_21 : f32 to vector<1x2xf32>
    %41 = arith.maximumf %39, %40 : vector<1x2xf32>
    %42 = vector.broadcast %41 : vector<1x2xf32> to vector<4x2xf32>
    %43 = arith.mulf %1, %42 : vector<4x2xf32>
    %cst_22 = arith.constant dense<0.000000e+00> : vector<4xf32>
    %44 = vector.multi_reduction <add>, %43, %cst_22 [1] : vector<4x2xf32> to vector<4xf32>
    %45 = vector.shape_cast %44 : vector<4xf32> to vector<4x1xf32>
    %46 = arith.addf %45, %2 : vector<4x1xf32>
    %47 = arith.negf %46 : vector<4x1xf32>
    %48 = math.exp %47 : vector<4x1xf32>
    %cst_23 = arith.constant 1.000000e+00 : f32
    %49 = vector.broadcast %cst_23 : f32 to vector<4x1xf32>
    %50 = arith.addf %49, %48 : vector<4x1xf32>
    %51 = arith.divf %49, %50 : vector<4x1xf32>
    %52 = vector.broadcast %51 : vector<4x1xf32> to vector<4x256xf32>
    %53 = arith.mulf %31, %52 : vector<4x256xf32>
    %c1_24 = arith.constant 1 : index
    %c0_25 = arith.constant 0 : index
    %c0_26 = arith.constant 0 : index
    %54 = vector.load %arg5[%c1_24, %c0_25, %c0_26] : memref<2x4x256xf32, #tpu.memory_space<vmem>>, vector<1x4x256xf32>
    %55 = vector.shape_cast %54 : vector<1x4x256xf32> to vector<4x256xf32>
    %56 = vector.shape_cast %53 : vector<4x256xf32> to vector<1x4x256xf32>
    tpu.vector_store %arg5[%c1_24, %c0_25, %c0_26], %56 {strides = array<i32>} : memref<2x4x256xf32, #tpu.memory_space<vmem>>, vector<1x4x256xf32>,
    return
  }
  func.func @transform_0(%arg0: i32) -> (i32, i32, i32) {
    %c0_i32 = arith.constant 0 : i32
    %c0_i32_0 = arith.constant 0 : i32
    %c0_i32_1 = arith.constant 0 : i32
    return %arg0, %c0_i32, %c0_i32_0 : i32, i32, i32
  }
  func.func @transform_1(%arg0: i32) -> (i32, i32) {
    %c0_i32 = arith.constant 0 : i32
    %c0_i32_0 = arith.constant 0 : i32
    %c0_i32_1 = arith.constant 0 : i32
    return %c0_i32, %c0_i32_0 : i32, i32
  }
  func.func @transform_2(%arg0: i32) -> (i32, i32) {
    %c0_i32 = arith.constant 0 : i32
    %c0_i32_0 = arith.constant 0 : i32
    %c0_i32_1 = arith.constant 0 : i32
    return %c0_i32, %c0_i32_0 : i32, i32
  }
  func.func @transform_3(%arg0: i32) -> (i32, i32) {
    %c0_i32 = arith.constant 0 : i32
    %c0_i32_0 = arith.constant 0 : i32
    %c0_i32_1 = arith.constant 0 : i32
    return %c0_i32, %c0_i32_0 : i32, i32
  }
  func.func @transform_4(%arg0: i32) -> (i32, i32, i32) {
    %c0_i32 = arith.constant 0 : i32
    %c0_i32_0 = arith.constant 0 : i32
    %c0_i32_1 = arith.constant 0 : i32
    return %arg0, %c0_i32, %c0_i32_0 : i32, i32, i32
  }
}

</mosaic_0001>

<llo_original>
// kernel: tpu_custom_call.1
$region0: #{tpu_custom_call.1}
  #allocation0 [shape = 'u32[]', space=smem, size = 0x4, offset = 0x4, fixed_abs, tag = 'smem constant byte address 0x4 - core index']
  #allocation1 [shape = 'u32[144,128]{1,0:T(1,128)}', space=vmem, size = 0x12000, scoped, tag = 'internal scratch']
  %s0 = inlined_call_operand.vmem [shape: f32[2,4,256], index: 0, kind: input, shape index: {}]
  %s1 = inlined_call_operand.vmem [shape: f32[4,2], index: 1, kind: input, shape index: {}]
  %s2 = inlined_call_operand.vmem [shape: f32[4,2], index: 2, kind: input, shape index: {}]
  %s3 = inlined_call_operand.vmem [shape: f32[4,1], index: 3, kind: input, shape index: {}]
  %s4 = inlined_call_operand.hbm [shape: f32[2,4,256], index: 4, kind: output, shape index: {}]
  %s5 = sld [smem:[#allocation0]]
  $region26: #{tpu_custom_call.1} parent=0
    _
  %s7 = ssub.s32 1, %s5
  %s8 = scalar_select 0, %s7, %s5
  $region1: #{tpu_custom_call.1} parent=0
    #allocation2 [shape = 'u8[8192]{0}', space=vmem, size = 0x2000, scoped, tag = 'output window, operand 0, single buffered']
    #allocation3 [shape = 's32[1]{0}', space=sflag, size = 0x4, scoped, tag = 'scoped memory for tpu_custom_call.1']
    %9 = vsyncpa [#allocation3], 0
    // Predicated region
    $region2: #{tpu_custom_call.1} parent=1 // pred_check
      _
    $region3: #{tpu_custom_call.1} parent=1 // pred_check_branch
      %11 = sbr.rel (0) target = $region5
    $region4: #{tpu_custom_call.1} parent=1 // pred_region
      _
    $region5: #{tpu_custom_call.1} parent=1 // pred_fallthru
      _
    // Predicated region
    $region6: #{tpu_custom_call.1} parent=1 // pred_check
      _
    $region7: #{tpu_custom_call.1} parent=1 // pred_check_branch
      %13 = sbr.rel (0) target = $region9
    $region8: #{tpu_custom_call.1} parent=1 // pred_region
      _
    $region9: #{tpu_custom_call.1} parent=1 // pred_fallthru
      _
    // Predicated region
    $region10: #{tpu_custom_call.1} parent=1 // pred_check
      _
    $region11: #{tpu_custom_call.1} parent=1 // pred_check_branch
      %15 = sbr.rel (0) target = $region13
    $region12: #{tpu_custom_call.1} parent=1 // pred_region
      _
    $region13: #{tpu_custom_call.1} parent=1 // pred_fallthru
      _
    // Predicated region
    $region14: #{tpu_custom_call.1} parent=1 // pred_check
      _
    $region15: #{tpu_custom_call.1} parent=1 // pred_check_branch
      %17 = sbr.rel (0) target = $region17
    $region16: #{tpu_custom_call.1} parent=1 // pred_region
      _
    $region17: #{tpu_custom_call.1} parent=1 // pred_fallthru
      _
    %v18 = vld [vmem:[%s1] sm:$0xf]
    %v19 = vld [vmem:[%s2] sm:$0xf]
    %v20 = vld [vmem:[%s3] sm:$0xf]
    %v21 = vld [vmem:[%s0] sm:$0xff]
    %v23 = vcombine.high %v21, %v21
    %vm25 = vcmask 1043456
    %v26 = vsel %vm25, %v21, 0.0
    %v27 = vsel %vm25, %v23, 0.0
    %v28 = vadd.f32 %v26, %v27
    %29 = vadd.xlane.f32.xlu0 %v28
    %v30 = vpop.xlane.xlu0 %29
    %v31 = vrcp.pop 256.0
    %v32 = vmul.f32 %v30, %v31
    %v33 = vmul.f32 %v18, %v32
    %vm34 = vcmask 11264
    %v35 = vsel %vm34, %v33, 0.0
    %v36 = vrot.slane %v35, 4
    %v37 = vadd.f32 %v35, %v36
    %v38 = vrot.slane %v37, 2
    %v39 = vadd.f32 %v37, %v38
    %v40 = vrot.slane %v39, 1
    %v41 = vadd.f32 %v39, %v40
    %v42 = vmax.f32 %v41, 0.0
    %v43 = vmul.f32 %v19, %v42
    %v44 = vsel %vm34, %v43, 0.0
    %45 = vadd.xlane.f32.xlu0 %v44
    %v46 = vpop.xlane.xlu0 %45
    %v47 = vadd.f32 %v46, %v20
    %v48 = vxor.u32 %v47, 2147483648
    %v49 = vmul.f32 %v48, 1.442695
    %v50 = vpow.pop %v49
    %v51 = vadd.f32 %v50, 1.0
    %v52 = vrcp.pop %v51
    %v53 = vmul.f32 1.0, %v52
    %55 = vset.pattern.permute.xlu0 0
    %56 = vperm.xlu0 %55, %v53
    %v57 = vpop.permute.xlu0 %56
    %v59 = vunpack.c.l.s4 839922192
    %v60 = vunpack.c.0.s8 %v59
    %v61 = vlaneseq
    %v62 = vshrl.u32 %v61, 7
    %v63 = vsub.s32 %v60, %v62
    %v64 = vrot.slane %v57, %v63
    %v66 = vmul.f32 %v21, %v64
    %67 = vst [vmem:[#allocation2] sm:$0xff] %v66
    %s68 = scalar_lea.vmem %s0, 8
    %v69 = vld [vmem:[%s68] sm:$0xff]
    %v71 = vcombine.high %v69, %v69
    %v73 = vsel %vm25, %v69, 0.0
    %v74 = vsel %vm25, %v71, 0.0
    %v75 = vadd.f32 %v73, %v74
    %76 = vadd.xlane.f32.xlu0 %v75
    %v77 = vpop.xlane.xlu0 %76
    %v78 = vmul.f32 %v77, %v31
    %v79 = vmul.f32 %v18, %v78
    %v80 = vsel %vm34, %v79, 0.0
    %v81 = vrot.slane %v80, 4
    %v82 = vadd.f32 %v80, %v81
    %v83 = vrot.slane %v82, 2
    %v84 = vadd.f32 %v82, %v83
    %v85 = vrot.slane %v84, 1
    %v86 = vadd.f32 %v84, %v85
    %v87 = vmax.f32 %v86, 0.0
    %v88 = vmul.f32 %v19, %v87
    %v89 = vsel %vm34, %v88, 0.0
    %90 = vadd.xlane.f32.xlu0 %v89
    %v91 = vpop.xlane.xlu0 %90
    %v92 = vadd.f32 %v91, %v20
    %v93 = vxor.u32 %v92, 2147483648
    %v94 = vmul.f32 %v93, 1.442695
    %v95 = vpow.pop %v94
    %v96 = vadd.f32 %v95, 1.0
    %v97 = vrcp.pop %v96
    %v98 = vmul.f32 1.0, %v97
    %100 = vset.pattern.permute.xlu0 0
    %101 = vperm.xlu0 %100, %v98
    %v102 = vpop.permute.xlu0 %101
    %v104 = vunpack.c.l.s4 839922192
    %v105 = vunpack.c.0.s8 %v104
    %v106 = vlaneseq
    %v107 = vshrl.u32 %v106, 7
    %v108 = vsub.s32 %v105, %v107
    %v109 = vrot.slane %v102, %v108
    %v111 = vmul.f32 %v69, %v109
    %s112 = scalar_lea.vmem [#allocation2], 8
    %113 = vst [vmem:[%s112] sm:$0xff] %v111
    // Predicated region
    $region18: #{tpu_custom_call.1} parent=1 // pred_check
      _
    $region19: #{tpu_custom_call.1} parent=1 // pred_check_branch
      %115 = sbr.rel (0) target = $region21
    $region20: #{tpu_custom_call.1} parent=1 // pred_region
      %s117 = ssub.s32 256, 256
      %118 = vsyncadd [#allocation3], %s117
      %s119 = sshll.u32 [#allocation2], 4
      %s120 = int_to_ptr.vmem [resolvable:$true] %s119
      %125 = dma.vmem_to_hbm [thread:$0]  %s120, 256, %s4, [#allocation3], 128, 128, 8
    $region21: #{tpu_custom_call.1} parent=1 // pred_fallthru
      _
    // Predicated region
    $region22: #{tpu_custom_call.1} parent=1 // pred_check
      _
    $region23: #{tpu_custom_call.1} parent=1 // pred_check_branch
      %127 = sbr.rel (0) target = $region25
    $region24: #{tpu_custom_call.1} parent=1 // pred_region
      %128 = dma.done [#allocation3], 256
    $region25: #{tpu_custom_call.1} parent=1 // pred_fallthru
      _
    %129 = vsyncpa [#allocation3], 1

</llo_original>
